<compile_context>
chip_gen: v7x
topology: tpu7x:2x2x1
jax: 0.10.0
libtpu: 0.0.40
codegen_flags: <defaults>
</compile_context>

<pallas_src>
import functools

import jax
import jax.numpy as jnp
from jax import lax
from jax.experimental import pallas as pl
from jax.experimental.pallas import tpu as pltpu

FLOAT_MIN = -3.4e38  # matches ray.rllib.utils.torch_utils.FLOAT_MIN
LANE = 128


def _round_up(x, m):
    return (x + m - 1) // m * m


def _pad2d(x, rows, cols, value=0.0):
    return jnp.pad(
        x, ((0, rows - x.shape[0]), (0, cols - x.shape[1])), constant_values=value
    )


# --------------------------------------------------------------------------
# Kernel
# --------------------------------------------------------------------------
def distribution_task_kernel(
    flag_ref,                        # SMEM scalar-prefetch (1,) int32
    prev_ref,                        # VMEM (tile_b, S)  f32
    curr_ref,                        # VMEM (tile_b, S)  f32
    mask_ref,                        # VMEM (tile_b, AP) f32 (padded cols = 1.0)
    w0a_ref, w0b_ref, b0_ref,        # (S, S) bf16, (S, S) bf16, (1, S) f32
    w1_ref, b1_ref,                  # (S, F1) bf16, (1, F1) f32
    w2_ref, b2_ref,                  # (F1, F2) bf16, (1, F2) f32
    w3_ref, b3_ref,                  # (F2, AP) bf16, (1, AP) f32
    out_ref,                         # VMEM (tile_b, AP) f32
    *,
    num_valid,                       # static: number of real action columns
):
    use_dist = flag_ref[0] != 0

    # dist_flag != 0: fc1 input = relu(fc0(cat(prev, curr))) computed as two
    # half-matmuls.  dist_flag == 0: fc1 input = curr (matches PyTorch, which
    # feeds raw curr_Node into fc1).  lax.cond returns the value directly (no
    # VMEM scratch roundtrip); fc0's matmuls are skipped entirely on the
    # flag==0 path.
    def fc0_branch():
        h0 = (
            jnp.dot(prev_ref[...].astype(jnp.bfloat16), w0a_ref[...],
                    preferred_element_type=jnp.float32)
            + jnp.dot(curr_ref[...].astype(jnp.bfloat16), w0b_ref[...],
                      preferred_element_type=jnp.float32)
        )
        return jnp.maximum(h0 + b0_ref[...], 0.0)

    def skip_branch():
        return curr_ref[...]

    x1 = lax.cond(use_dist, fc0_branch, skip_branch)           # (tile_b, S) f32

    h1 = jnp.maximum(
        jnp.dot(x1.astype(jnp.bfloat16), w1_ref[...],
                preferred_element_type=jnp.float32) + b1_ref[...], 0.0)
    h2 = jnp.maximum(
        jnp.dot(h1.astype(jnp.bfloat16), w2_ref[...],
                preferred_element_type=jnp.float32) + b2_ref[...], 0.0)
    h3 = jnp.maximum(
        jnp.dot(h2.astype(jnp.bfloat16), w3_ref[...],
                preferred_element_type=jnp.float32) + b3_ref[...], 0.0)

    # Softmax over the first `num_valid` action columns only.  Padded columns
    # are forced to FLOAT_MIN before the max, so exp underflows to exactly 0
    # for them -- no second select needed.
    col = lax.broadcasted_iota(jnp.int32, h3.shape, 1)
    h3m = jnp.where(col < num_valid, h3, FLOAT_MIN)
    m = jnp.max(h3m, axis=1, keepdims=True)
    e = jnp.exp(h3m - m)
    p = e * pl.reciprocal(jnp.sum(e, axis=1, keepdims=True), approx=True)

    # inf_mask = clamp(log(mask), min=FLOAT_MIN); padded mask entries are 1.0
    # so their inf_mask contribution is 0.
    inf_mask = jnp.maximum(jnp.log(mask_ref[...]), FLOAT_MIN)
    out_ref[...] = p + inf_mask


# --------------------------------------------------------------------------
# Wrapper
# --------------------------------------------------------------------------
def distribution_task_forward(dist_flag, prev_node, curr_node, action_mask,
                              prepared_params, *, max_tile_b=1024, min_grid=1):
    """dist_flag: int32 (1,); prev/curr_node: (B, S); action_mask: (B, A).

    `min_grid` >= 2 lets v7x shard the parallel batch axis across both
    TensorCores; on v5e/v6e (1 TC) leave it at 1.
    """
    p = prepared_params
    B, S = curr_node.shape
    A = action_mask.shape[1]
    AP = p["w3"].shape[1]

    # Tile selection: single grid step when B fits, otherwise split evenly so
    # last-tile dead rows stay < 8 instead of up to tile_b - 8.
    grid_b = max(min_grid, pl.cdiv(B, max_tile_b))
    tile_b = _round_up(pl.cdiv(B, grid_b), 8)
    grid_b = pl.cdiv(B, tile_b)
    Bp = grid_b * tile_b

    prev_p = _pad2d(prev_node.astype(jnp.float32), Bp, S)
    curr_p = _pad2d(curr_node.astype(jnp.float32), Bp, S)
    mask_p = _pad2d(action_mask.astype(jnp.float32), Bp, AP, value=1.0)

    def batch_map(i, flag):
        return (i, 0)

    def const_map(i, flag):
        return (0, 0)

    def batch_spec(cols):
        return pl.BlockSpec((tile_b, cols), batch_map)

    def weight_spec(arr):
        return pl.BlockSpec(arr.shape, const_map)

    in_specs = [
        batch_spec(S),               # prev
        batch_spec(S),               # curr
        batch_spec(AP),              # mask (padded to lane width)
        weight_spec(p["w0a"]), weight_spec(p["w0b"]), weight_spec(p["b0"]),
        weight_spec(p["w1"]), weight_spec(p["b1"]),
        weight_spec(p["w2"]), weight_spec(p["b2"]),
        weight_spec(p["w3"]), weight_spec(p["b3"]),
    ]
    out_spec = pl.BlockSpec((tile_b, AP), batch_map)

    kernel = functools.partial(distribution_task_kernel, num_valid=A)

    out_padded = pl.pallas_call(
        kernel,
        out_shape=jax.ShapeDtypeStruct((Bp, AP), jnp.float32),
        grid_spec=pltpu.PrefetchScalarGridSpec(
            num_scalar_prefetch=1,
            grid=(grid_b,),
            in_specs=in_specs,
            out_specs=out_spec,
        ),
        compiler_params=pltpu.CompilerParams(
            dimension_semantics=("parallel",),
        ),
    )(
        dist_flag.astype(jnp.int32),
        prev_p, curr_p, mask_p,
        p["w0a"], p["w0b"], p["b0"],
        p["w1"], p["b1"], p["w2"], p["b2"], p["w3"], p["b3"],
    )
    return out_padded[:B, :A]


# --------------------------------------------------------------------------
# Parameter helpers
# --------------------------------------------------------------------------
def _init_params(key, state_size, fc1_units, fc2_units, num_outputs):
    ks = jax.random.split(key, 8)
    scale = 0.1
    # PyTorch nn.Linear weight is (out, in); stored transposed (in, out).
    return {
        "w0": scale * jax.random.normal(ks[0], (2 * state_size, state_size), jnp.float32),
        "b0": scale * jax.random.normal(ks[1], (1, state_size), jnp.float32),
        "w1": scale * jax.random.normal(ks[2], (state_size, fc1_units), jnp.float32),
        "b1": scale * jax.random.normal(ks[3], (1, fc1_units), jnp.float32),
        "w2": scale * jax.random.normal(ks[4], (fc1_units, fc2_units), jnp.float32),
        "b2": scale * jax.random.normal(ks[5], (1, fc2_units), jnp.float32),
        "w3": scale * jax.random.normal(ks[6], (fc2_units, num_outputs), jnp.float32),
        "b3": scale * jax.random.normal(ks[7], (1, num_outputs), jnp.float32),
    }


def prepare_params(params, state_size, num_outputs):
    """Split fc0, cast weights to bf16 (MXU inputs), keep biases f32, and pad
    only the final layer's output dim to a multiple of 128 (lane-dense store)."""
    S = state_size
    AP = _round_up(num_outputs, LANE)
    return {
        "w0a": params["w0"][:S].astype(jnp.bfloat16),          # prev half
        "w0b": params["w0"][S:].astype(jnp.bfloat16),          # curr half
        "b0": params["b0"].astype(jnp.float32),
        "w1": params["w1"].astype(jnp.bfloat16),
        "b1": params["b1"].astype(jnp.float32),
        "w2": params["w2"].astype(jnp.bfloat16),
        "b2": params["b2"].astype(jnp.float32),
        "w3": _pad2d(params["w3"], params["w3"].shape[0], AP).astype(jnp.bfloat16),
        "b3": _pad2d(params["b3"], 1, AP).astype(jnp.float32),
    }


# --------------------------------------------------------------------------
# Pure-JAX reference (mirrors the PyTorch forward, full f32)
# --------------------------------------------------------------------------
def _reference(dist_flag, prev_node, curr_node, action_mask, params):
    if int(dist_flag[0]) != 0:
        merged = jnp.concatenate([prev_node, curr_node], axis=1)
        x = jax.nn.relu(merged @ params["w0"] + params["b0"])
    else:
        x = curr_node
    x = jax.nn.relu(x @ params["w1"] + params["b1"])
    x = jax.nn.relu(x @ params["w2"] + params["b2"])
    x = jax.nn.relu(x @ params["w3"] + params["b3"])
    x = jax.nn.softmax(x, axis=1)
    inf_mask = jnp.maximum(jnp.log(action_mask), FLOAT_MIN)
    return x + inf_mask


if __name__ == "__main__":
    B, STATE, FC1, FC2, NUM_OUT = 32, 32, 64, 64, 16

    key = jax.random.PRNGKey(0)
    kp, k1, k2, k3 = jax.random.split(key, 4)
    params = _init_params(kp, STATE, FC1, FC2, NUM_OUT)
    prepared = prepare_params(params, STATE, NUM_OUT)

    prev_node = jax.random.normal(k1, (B, STATE), jnp.float32)
    curr_node = jax.random.normal(k2, (B, STATE), jnp.float32)
    action_mask = (jax.random.uniform(k3, (B, NUM_OUT)) > 0.3).astype(jnp.float32)

    # Tolerance: bf16 MXU inputs (f32 accumulation) + approx reciprocal give
    # ~1e-3 level differences vs the pure-f32 PyTorch-equivalent reference.
    TOL = 1e-2
    for flag_val in (1, 0):
        dist_flag = jnp.array([flag_val], dtype=jnp.int32)
        for max_tile_b in (1024, 16):   # single-tile path and 2-tile grid path
            out = distribution_task_forward(
                dist_flag, prev_node, curr_node, action_mask, prepared,
                max_tile_b=max_tile_b)
            jax.block_until_ready(out)
            ref = _reference(dist_flag, prev_node, curr_node, action_mask, params)
            assert out.shape == (B, NUM_OUT)
            assert jnp.allclose(out, ref, rtol=TOL, atol=TOL), (
                flag_val, max_tile_b, float(jnp.max(jnp.abs(out - ref))))

    print("KERNEL_OK")
</pallas_src>

<mosaic_0001>
module attributes {stable_mosaic.version = 11 : i64} {
  func.func @distribution_task_kernel(%arg0: i32, %arg1: memref<1xi32, #tpu.memory_space<smem>>, %arg2: memref<32x32xf32, #tpu.memory_space<vmem>>, %arg3: memref<32x32xf32, #tpu.memory_space<vmem>>, %arg4: memref<32x128xf32, #tpu.memory_space<vmem>>, %arg5: memref<32x32xbf16, #tpu.memory_space<vmem>>, %arg6: memref<32x32xbf16, #tpu.memory_space<vmem>>, %arg7: memref<1x32xf32, #tpu.memory_space<vmem>>, %arg8: memref<32x64xbf16, #tpu.memory_space<vmem>>, %arg9: memref<1x64xf32, #tpu.memory_space<vmem>>, %arg10: memref<64x64xbf16, #tpu.memory_space<vmem>>, %arg11: memref<1x64xf32, #tpu.memory_space<vmem>>, %arg12: memref<64x128xbf16, #tpu.memory_space<vmem>>, %arg13: memref<1x128xf32, #tpu.memory_space<vmem>>, %arg14: memref<32x128xf32, #tpu.memory_space<vmem>>) attributes {dimension_semantics = [#tpu.dimension_semantics<parallel>], iteration_bounds = array<i64: 1>, scalar_prefetch = 1 : i64, scratch_operands = 0 : i64, tpu.core_type = #tpu.core_type<tc>, window_params = [{transform_indices = @transform_0, window_bounds = array<i64: 32, 32>}, {transform_indices = @transform_1, window_bounds = array<i64: 32, 32>}, {transform_indices = @transform_2, window_bounds = array<i64: 32, 128>}, {pipeline_mode = #tpu.pipeline_mode<synchronous>, transform_indices = @transform_3, window_bounds = array<i64: 32, 32>}, {pipeline_mode = #tpu.pipeline_mode<synchronous>, transform_indices = @transform_4, window_bounds = array<i64: 32, 32>}, {pipeline_mode = #tpu.pipeline_mode<synchronous>, transform_indices = @transform_5, window_bounds = array<i64: 1, 32>}, {pipeline_mode = #tpu.pipeline_mode<synchronous>, transform_indices = @transform_6, window_bounds = array<i64: 32, 64>}, {pipeline_mode = #tpu.pipeline_mode<synchronous>, transform_indices = @transform_7, window_bounds = array<i64: 1, 64>}, {pipeline_mode = #tpu.pipeline_mode<synchronous>, transform_indices = @transform_8, window_bounds = array<i64: 64, 64>}, {pipeline_mode = #tpu.pipeline_mode<synchronous>, transform_indices = @transform_9, window_bounds = array<i64: 1, 64>}, {pipeline_mode = #tpu.pipeline_mode<synchronous>, transform_indices = @transform_10, window_bounds = array<i64: 64, 128>}, {pipeline_mode = #tpu.pipeline_mode<synchronous>, transform_indices = @transform_11, window_bounds = array<i64: 1, 128>}, {transform_indices = @transform_12, window_bounds = array<i64: 32, 128>}]} {
    %c0 = arith.constant 0 : index
    %0 = memref.load %arg1[%c0] : memref<1xi32, #tpu.memory_space<smem>>
    %c0_i32 = arith.constant 0 : i32
    %1 = arith.cmpi ne, %0, %c0_i32 : i32
    %2 = arith.extui %1 : i1 to i32
    %c0_i32_0 = arith.constant 0 : i32
    %3 = arith.cmpi ne, %2, %c0_i32_0 : i32
    %4 = scf.if %3 -> (vector<32x32xf32>) {
      %c0_26 = arith.constant 0 : index
      %c0_27 = arith.constant 0 : index
      %50 = vector.load %arg2[%c0_26, %c0_27] : memref<32x32xf32, #tpu.memory_space<vmem>>, vector<32x32xf32>
      %51 = arith.truncf %50 : vector<32x32xf32> to vector<32x32xbf16>
      %c0_28 = arith.constant 0 : index
      %c0_29 = arith.constant 0 : index
      %52 = vector.load %arg5[%c0_28, %c0_29] : memref<32x32xbf16, #tpu.memory_space<vmem>>, vector<32x32xbf16>
      %cst_30 = arith.constant dense<0.000000e+00> : vector<32x32xf32>
      %53 = tpu.matmul %51, %52, %cst_30 {dimension_numbers = #tpu.dot_dimension_numbers<[1], [0], [0], [1], [0, 0, 1, 1], [], []>} : vector<32x32xbf16>, vector<32x32xbf16>, vector<32x32xf32> -> vector<32x32xf32>
      %c0_31 = arith.constant 0 : index
      %c0_32 = arith.constant 0 : index
      %54 = vector.load %arg3[%c0_31, %c0_32] : memref<32x32xf32, #tpu.memory_space<vmem>>, vector<32x32xf32>
      %55 = arith.truncf %54 : vector<32x32xf32> to vector<32x32xbf16>
      %c0_33 = arith.constant 0 : index
      %c0_34 = arith.constant 0 : index
      %56 = vector.load %arg6[%c0_33, %c0_34] : memref<32x32xbf16, #tpu.memory_space<vmem>>, vector<32x32xbf16>
      %cst_35 = arith.constant dense<0.000000e+00> : vector<32x32xf32>
      %57 = tpu.matmul %55, %56, %cst_35 {dimension_numbers = #tpu.dot_dimension_numbers<[1], [0], [0], [1], [0, 0, 1, 1], [], []>} : vector<32x32xbf16>, vector<32x32xbf16>, vector<32x32xf32> -> vector<32x32xf32>
      %58 = arith.addf %53, %57 : vector<32x32xf32>
      %c0_36 = arith.constant 0 : index
      %c0_37 = arith.constant 0 : index
      %59 = vector.load %arg7[%c0_36, %c0_37] : memref<1x32xf32, #tpu.memory_space<vmem>>, vector<1x32xf32>
      %60 = vector.broadcast %59 : vector<1x32xf32> to vector<32x32xf32>
      %61 = arith.addf %58, %60 : vector<32x32xf32>
      %cst_38 = arith.constant 0.000000e+00 : f32
      %62 = vector.broadcast %cst_38 : f32 to vector<32x32xf32>
      %63 = arith.maximumf %61, %62 : vector<32x32xf32>
      scf.yield %63 : vector<32x32xf32>
    } else {
      %c0_26 = arith.constant 0 : index
      %c0_27 = arith.constant 0 : index
      %50 = vector.load %arg3[%c0_26, %c0_27] : memref<32x32xf32, #tpu.memory_space<vmem>>, vector<32x32xf32>
      scf.yield %50 : vector<32x32xf32>
    }
    %5 = arith.truncf %4 : vector<32x32xf32> to vector<32x32xbf16>
    %c0_1 = arith.constant 0 : index
    %c0_2 = arith.constant 0 : index
    %6 = vector.load %arg8[%c0_1, %c0_2] : memref<32x64xbf16, #tpu.memory_space<vmem>>, vector<32x64xbf16>
    %cst = arith.constant dense<0.000000e+00> : vector<32x64xf32>
    %7 = tpu.matmul %5, %6, %cst {dimension_numbers = #tpu.dot_dimension_numbers<[1], [0], [0], [1], [0, 0, 1, 1], [], []>} : vector<32x32xbf16>, vector<32x64xbf16>, vector<32x64xf32> -> vector<32x64xf32>
    %c0_3 = arith.constant 0 : index
    %c0_4 = arith.constant 0 : index
    %8 = vector.load %arg9[%c0_3, %c0_4] : memref<1x64xf32, #tpu.memory_space<vmem>>, vector<1x64xf32>
    %9 = vector.broadcast %8 : vector<1x64xf32> to vector<32x64xf32>
    %10 = arith.addf %7, %9 : vector<32x64xf32>
    %cst_5 = arith.constant 0.000000e+00 : f32
    %11 = vector.broadcast %cst_5 : f32 to vector<32x64xf32>
    %12 = arith.maximumf %10, %11 : vector<32x64xf32>
    %13 = arith.truncf %12 : vector<32x64xf32> to vector<32x64xbf16>
    %c0_6 = arith.constant 0 : index
    %c0_7 = arith.constant 0 : index
    %14 = vector.load %arg10[%c0_6, %c0_7] : memref<64x64xbf16, #tpu.memory_space<vmem>>, vector<64x64xbf16>
    %cst_8 = arith.constant dense<0.000000e+00> : vector<32x64xf32>
    %15 = tpu.matmul %13, %14, %cst_8 {dimension_numbers = #tpu.dot_dimension_numbers<[1], [0], [0], [1], [0, 0, 1, 1], [], []>} : vector<32x64xbf16>, vector<64x64xbf16>, vector<32x64xf32> -> vector<32x64xf32>
    %c0_9 = arith.constant 0 : index
    %c0_10 = arith.constant 0 : index
    %16 = vector.load %arg11[%c0_9, %c0_10] : memref<1x64xf32, #tpu.memory_space<vmem>>, vector<1x64xf32>
    %17 = vector.broadcast %16 : vector<1x64xf32> to vector<32x64xf32>
    %18 = arith.addf %15, %17 : vector<32x64xf32>
    %cst_11 = arith.constant 0.000000e+00 : f32
    %19 = vector.broadcast %cst_11 : f32 to vector<32x64xf32>
    %20 = arith.maximumf %18, %19 : vector<32x64xf32>
    %21 = arith.truncf %20 : vector<32x64xf32> to vector<32x64xbf16>
    %c0_12 = arith.constant 0 : index
    %c0_13 = arith.constant 0 : index
    %22 = vector.load %arg12[%c0_12, %c0_13] : memref<64x128xbf16, #tpu.memory_space<vmem>>, vector<64x128xbf16>
    %cst_14 = arith.constant dense<0.000000e+00> : vector<32x128xf32>
    %23 = tpu.matmul %21, %22, %cst_14 {dimension_numbers = #tpu.dot_dimension_numbers<[1], [0], [0], [1], [0, 0, 1, 1], [], []>} : vector<32x64xbf16>, vector<64x128xbf16>, vector<32x128xf32> -> vector<32x128xf32>
    %c0_15 = arith.constant 0 : index
    %c0_16 = arith.constant 0 : index
    %24 = vector.load %arg13[%c0_15, %c0_16] : memref<1x128xf32, #tpu.memory_space<vmem>>, vector<1x128xf32>
    %25 = vector.broadcast %24 : vector<1x128xf32> to vector<32x128xf32>
    %26 = arith.addf %23, %25 : vector<32x128xf32>
    %cst_17 = arith.constant 0.000000e+00 : f32
    %27 = vector.broadcast %cst_17 : f32 to vector<32x128xf32>
    %28 = arith.maximumf %26, %27 : vector<32x128xf32>
    %29 = tpu.iota {dimensions = array<i32: 1>} : vector<32x128xi32>
    %c16_i32 = arith.constant 16 : i32
    %30 = vector.broadcast %c16_i32 : i32 to vector<32x128xi32>
    %31 = arith.cmpi slt, %29, %30 : vector<32x128xi32>
    %cst_18 = arith.constant -3.400000e+38 : f32
    %32 = vector.broadcast %cst_18 : f32 to vector<32x128xf32>
    %33 = arith.select %31, %28, %32 : vector<32x128xi1>, vector<32x128xf32>
    %cst_19 = arith.constant dense<0xFF800000> : vector<32xf32>
    %34 = vector.multi_reduction <maximumf>, %33, %cst_19 [1] : vector<32x128xf32> to vector<32xf32>
    %35 = vector.shape_cast %34 : vector<32xf32> to vector<32x1xf32>
    %36 = vector.broadcast %35 : vector<32x1xf32> to vector<32x128xf32>
    %37 = arith.subf %33, %36 : vector<32x128xf32>
    %38 = math.exp %37 : vector<32x128xf32>
    %cst_20 = arith.constant dense<0.000000e+00> : vector<32xf32>
    %39 = vector.multi_reduction <add>, %38, %cst_20 [1] : vector<32x128xf32> to vector<32xf32>
    %40 = vector.shape_cast %39 : vector<32xf32> to vector<32x1xf32>
    %41 = tpu.reciprocal %40 {approx = true} : vector<32x1xf32> -> vector<32x1xf32>
    %42 = vector.broadcast %41 : vector<32x1xf32> to vector<32x128xf32>
    %43 = arith.mulf %38, %42 : vector<32x128xf32>
    %c0_21 = arith.constant 0 : index
    %c0_22 = arith.constant 0 : index
    %44 = vector.load %arg4[%c0_21, %c0_22] : memref<32x128xf32, #tpu.memory_space<vmem>>, vector<32x128xf32>
    %45 = math.log %44 : vector<32x128xf32>
    %cst_23 = arith.constant -3.400000e+38 : f32
    %46 = vector.broadcast %cst_23 : f32 to vector<32x128xf32>
    %47 = arith.maximumf %45, %46 : vector<32x128xf32>
    %48 = arith.addf %43, %47 : vector<32x128xf32>
    %c0_24 = arith.constant 0 : index
    %c0_25 = arith.constant 0 : index
    %49 = vector.load %arg14[%c0_24, %c0_25] : memref<32x128xf32, #tpu.memory_space<vmem>>, vector<32x128xf32>
    tpu.vector_store %arg14[%c0_24, %c0_25], %48 {strides = array<i32>} : memref<32x128xf32, #tpu.memory_space<vmem>>, vector<32x128xf32>,
    return
  }
  func.func @transform_0(%arg0: i32, %arg1: memref<1xi32, #tpu.memory_space<smem>>) -> (i32, i32) {
    %c0_i32 = arith.constant 0 : i32
    %c0_i32_0 = arith.constant 0 : i32
    return %arg0, %c0_i32 : i32, i32
  }
  func.func @transform_1(%arg0: i32, %arg1: memref<1xi32, #tpu.memory_space<smem>>) -> (i32, i32) {
    %c0_i32 = arith.constant 0 : i32
    %c0_i32_0 = arith.constant 0 : i32
    return %arg0, %c0_i32 : i32, i32
  }
  func.func @transform_2(%arg0: i32, %arg1: memref<1xi32, #tpu.memory_space<smem>>) -> (i32, i32) {
    %c0_i32 = arith.constant 0 : i32
    %c0_i32_0 = arith.constant 0 : i32
    return %arg0, %c0_i32 : i32, i32
  }
  func.func @transform_3(%arg0: i32, %arg1: memref<1xi32, #tpu.memory_space<smem>>) -> (i32, i32) {
    %c0_i32 = arith.constant 0 : i32
    %c0_i32_0 = arith.constant 0 : i32
    %c0_i32_1 = arith.constant 0 : i32
    return %c0_i32, %c0_i32_0 : i32, i32
  }
  func.func @transform_4(%arg0: i32, %arg1: memref<1xi32, #tpu.memory_space<smem>>) -> (i32, i32) {
    %c0_i32 = arith.constant 0 : i32
    %c0_i32_0 = arith.constant 0 : i32
    %c0_i32_1 = arith.constant 0 : i32
    return %c0_i32, %c0_i32_0 : i32, i32
  }
  func.func @transform_5(%arg0: i32, %arg1: memref<1xi32, #tpu.memory_space<smem>>) -> (i32, i32) {
    %c0_i32 = arith.constant 0 : i32
    %c0_i32_0 = arith.constant 0 : i32
    %c0_i32_1 = arith.constant 0 : i32
    return %c0_i32, %c0_i32_0 : i32, i32
  }
  func.func @transform_6(%arg0: i32, %arg1: memref<1xi32, #tpu.memory_space<smem>>) -> (i32, i32) {
    %c0_i32 = arith.constant 0 : i32
    %c0_i32_0 = arith.constant 0 : i32
    %c0_i32_1 = arith.constant 0 : i32
    return %c0_i32, %c0_i32_0 : i32, i32
  }
  func.func @transform_7(%arg0: i32, %arg1: memref<1xi32, #tpu.memory_space<smem>>) -> (i32, i32) {
    %c0_i32 = arith.constant 0 : i32
    %c0_i32_0 = arith.constant 0 : i32
    %c0_i32_1 = arith.constant 0 : i32
    return %c0_i32, %c0_i32_0 : i32, i32
  }
  func.func @transform_8(%arg0: i32, %arg1: memref<1xi32, #tpu.memory_space<smem>>) -> (i32, i32) {
    %c0_i32 = arith.constant 0 : i32
    %c0_i32_0 = arith.constant 0 : i32
    %c0_i32_1 = arith.constant 0 : i32
    return %c0_i32, %c0_i32_0 : i32, i32
  }
  func.func @transform_9(%arg0: i32, %arg1: memref<1xi32, #tpu.memory_space<smem>>) -> (i32, i32) {
    %c0_i32 = arith.constant 0 : i32
    %c0_i32_0 = arith.constant 0 : i32
    %c0_i32_1 = arith.constant 0 : i32
    return %c0_i32, %c0_i32_0 : i32, i32
  }
  func.func @transform_10(%arg0: i32, %arg1: memref<1xi32, #tpu.memory_space<smem>>) -> (i32, i32) {
    %c0_i32 = arith.constant 0 : i32
    %c0_i32_0 = arith.constant 0 : i32
    %c0_i32_1 = arith.constant 0 : i32
    return %c0_i32, %c0_i32_0 : i32, i32
  }
  func.func @transform_11(%arg0: i32, %arg1: memref<1xi32, #tpu.memory_space<smem>>) -> (i32, i32) {
    %c0_i32 = arith.constant 0 : i32
    %c0_i32_0 = arith.constant 0 : i32
    %c0_i32_1 = arith.constant 0 : i32
    return %c0_i32, %c0_i32_0 : i32, i32
  }
  func.func @transform_12(%arg0: i32, %arg1: memref<1xi32, #tpu.memory_space<smem>>) -> (i32, i32) {
    %c0_i32 = arith.constant 0 : i32
    %c0_i32_0 = arith.constant 0 : i32
    return %arg0, %c0_i32 : i32, i32
  }
}

</mosaic_0001>

<llo_original>
// kernel: tpu_custom_call.1
$region0: #{tpu_custom_call.1}
  #allocation0 [shape = 'u32[]', space=smem, size = 0x4, offset = 0x4, fixed_abs, tag = 'smem constant byte address 0x4 - core index']
  #allocation1 [shape = 'u32[144,128]{1,0:T(1,128)}', space=vmem, size = 0x12000, scoped, tag = 'internal scratch']
  #allocation2 [shape = 's32[1]{0}', space=sflag, size = 0x4, scoped, tag = 'scoped memory for tpu_custom_call.1']
  #allocation3 [shape = 's32[1]{0:T(128)S(6)}', space=smem, size = 0x200, scoped, tag = 'prefetched SMEM operand 0']
  %s0 = inlined_call_operand.<no memory space> [shape: s32[1], index: 0, kind: input, shape index: {}]
  %s1 = inlined_call_operand.hbm [shape: f32[32,32], index: 1, kind: input, shape index: {}]
  %s2 = inlined_call_operand.hbm [shape: f32[32,32], index: 2, kind: input, shape index: {}]
  %s3 = inlined_call_operand.hbm [shape: f32[32,128], index: 3, kind: input, shape index: {}]
  %s4 = inlined_call_operand.hbm [shape: bf16[32,32], index: 4, kind: input, shape index: {}]
  %s5 = inlined_call_operand.hbm [shape: bf16[32,32], index: 5, kind: input, shape index: {}]
  %s6 = inlined_call_operand.vmem [shape: f32[1,32], index: 6, kind: input, shape index: {}]
  %s7 = inlined_call_operand.hbm [shape: bf16[32,64], index: 7, kind: input, shape index: {}]
  %s8 = inlined_call_operand.vmem [shape: f32[1,64], index: 8, kind: input, shape index: {}]
  %s9 = inlined_call_operand.vmem [shape: bf16[64,64], index: 9, kind: input, shape index: {}]
  %s10 = inlined_call_operand.vmem [shape: f32[1,64], index: 10, kind: input, shape index: {}]
  %s11 = inlined_call_operand.hbm [shape: bf16[64,128], index: 11, kind: input, shape index: {}]
  %s12 = inlined_call_operand.vmem [shape: f32[1,128], index: 12, kind: input, shape index: {}]
  %s13 = inlined_call_operand.hbm [shape: f32[32,128], index: 13, kind: output, shape index: {}]
  %s14 = sld [smem:[#allocation0]]
  $region94: #{tpu_custom_call.1} parent=0
    _
  %s16 = ssub.s32 1, %s14
  %s17 = scalar_select 0, %s16, %s14
  %18 = sst [smem:[#allocation3]] %s0
  $region1: #{tpu_custom_call.1} parent=0
    #allocation4 [shape = 'u8[16384]{0}', space=vmem, size = 0x4000, scoped, tag = 'input window, operand 1, single buffered']
    #allocation5 [shape = 's32[1]{0}', space=sflag, size = 0x4, scoped, tag = 'scoped memory for tpu_custom_call.1']
    #allocation6 [shape = 's32[1]{0}', space=sflag, size = 0x4, scoped, tag = 'scoped memory for tpu_custom_call.1']
    #allocation7 [shape = 'u8[16384]{0}', space=vmem, size = 0x4000, scoped, tag = 'input window, operand 2, single buffered']
    #allocation8 [shape = 's32[1]{0}', space=sflag, size = 0x4, scoped, tag = 'scoped memory for tpu_custom_call.1']
    #allocation9 [shape = 'u8[16384]{0}', space=vmem, size = 0x4000, scoped, tag = 'input window, operand 3, single buffered']
    #allocation10 [shape = 'u8[8192]{0}', space=vmem, size = 0x2000, scoped, tag = 'input window, operand 4, single buffered']
    #allocation11 [shape = 's32[1]{0}', space=sflag, size = 0x4, scoped, tag = 'scoped memory for tpu_custom_call.1']
    #allocation12 [shape = 'u8[8192]{0}', space=vmem, size = 0x2000, scoped, tag = 'input window, operand 5, single buffered']
    #allocation13 [shape = 'u8[8192]{0}', space=vmem, size = 0x2000, scoped, tag = 'input window, operand 7, single buffered']
    #allocation14 [shape = 's32[1]{0}', space=sflag, size = 0x4, scoped, tag = 'scoped memory for tpu_custom_call.1']
    #allocation15 [shape = 'u8[16384]{0}', space=vmem, size = 0x4000, scoped, tag = 'input window, operand 11, single buffered']
    #allocation16 [shape = 'u8[16384]{0}', space=vmem, size = 0x4000, scoped, tag = 'output window, operand 0, single buffered']
    %19 = vsyncpa [#allocation5], 0
    %20 = vsyncpa [#allocation8], 0
    %21 = vsyncpa [#allocation11], 0
    %22 = vsyncpa [#allocation14], 0
    %23 = vsyncpa [#allocation6], 0
    // Predicated region
    $region2: #{tpu_custom_call.1} parent=1 // pred_check
      _
    $region3: #{tpu_custom_call.1} parent=1 // pred_check_branch
      %25 = sbr.rel (0) target = $region5
    $region4: #{tpu_custom_call.1} parent=1 // pred_region
      %s27 = ssub.s32 512, 512
      %28 = vsyncadd [#allocation5], %s27
      %s29 = sshll.u32 [#allocation4], 4
      %s30 = int_to_ptr.vmem [resolvable:$true] %s29
      %35 = dma.hbm_to_vmem [thread:$0]  %s1, 512, %s30, [#allocation5], 128, 128, 8
    $region5: #{tpu_custom_call.1} parent=1 // pred_fallthru
      _
    // Predicated region
    $region6: #{tpu_custom_call.1} parent=1 // pred_check
      _
    $region7: #{tpu_custom_call.1} parent=1 // pred_check_branch
      %37 = sbr.rel (0) target = $region9
    $region8: #{tpu_custom_call.1} parent=1 // pred_region
      %s39 = ssub.s32 512, 512
      %40 = vsyncadd [#allocation8], %s39
      %s41 = sshll.u32 [#allocation7], 4
      %s42 = int_to_ptr.vmem [resolvable:$true] %s41
      %47 = dma.hbm_to_vmem [thread:$0]  %s2, 512, %s42, [#allocation8], 128, 128, 8
    $region9: #{tpu_custom_call.1} parent=1 // pred_fallthru
      _
    // Predicated region
    $region10: #{tpu_custom_call.1} parent=1 // pred_check
      _
    $region11: #{tpu_custom_call.1} parent=1 // pred_check_branch
      %49 = sbr.rel (0) target = $region13
    $region12: #{tpu_custom_call.1} parent=1 // pred_region
      %s51 = ssub.s32 512, 512
      %52 = vsyncadd [#allocation8], %s51
      %s53 = sshll.u32 [#allocation9], 4
      %s54 = int_to_ptr.vmem [resolvable:$true] %s53
      %59 = dma.hbm_to_vmem [thread:$0]  %s3, 512, %s54, [#allocation8], 128, 128, 8
    $region13: #{tpu_custom_call.1} parent=1 // pred_fallthru
      _
    // Predicated region
    $region14: #{tpu_custom_call.1} parent=1 // pred_check
      _
    $region15: #{tpu_custom_call.1} parent=1 // pred_check_branch
      %61 = sbr.rel (0) target = $region17
    $region16: #{tpu_custom_call.1} parent=1 // pred_region
      %s63 = ssub.s32 256, 256
      %64 = vsyncadd [#allocation11], %s63
      %s65 = sshll.u32 [#allocation10], 4
      %s66 = int_to_ptr.vmem [resolvable:$true] %s65
      %71 = dma.hbm_to_vmem [thread:$0]  %s4, 256, %s66, [#allocation11], 64, 64, 4
    $region17: #{tpu_custom_call.1} parent=1 // pred_fallthru
      _
    // Predicated region
    $region18: #{tpu_custom_call.1} parent=1 // pred_check
      _
    $region19: #{tpu_custom_call.1} parent=1 // pred_check_branch
      %73 = sbr.rel (0) target = $region21
    $region20: #{tpu_custom_call.1} parent=1 // pred_region
      %s75 = ssub.s32 256, 256
      %76 = vsyncadd [#allocation11], %s75
      %s77 = sshll.u32 [#allocation12], 4
      %s78 = int_to_ptr.vmem [resolvable:$true] %s77
      %83 = dma.hbm_to_vmem [thread:$0]  %s5, 256, %s78, [#allocation11], 64, 64, 4
    $region21: #{tpu_custom_call.1} parent=1 // pred_fallthru
      _
    // Predicated region
    $region22: #{tpu_custom_call.1} parent=1 // pred_check
      _
    $region23: #{tpu_custom_call.1} parent=1 // pred_check_branch
      %85 = sbr.rel (0) target = $region25
    $region24: #{tpu_custom_call.1} parent=1 // pred_region
      _
    $region25: #{tpu_custom_call.1} parent=1 // pred_fallthru
      _
    // Predicated region
    $region26: #{tpu_custom_call.1} parent=1 // pred_check
      _
    $region27: #{tpu_custom_call.1} parent=1 // pred_check_branch
      %87 = sbr.rel (0) target = $region29
    $region28: #{tpu_custom_call.1} parent=1 // pred_region
      %s89 = ssub.s32 256, 256
      %90 = vsyncadd [#allocation14], %s89
      %s91 = sshll.u32 [#allocation13], 4
      %s92 = int_to_ptr.vmem [resolvable:$true] %s91
      %97 = dma.hbm_to_vmem [thread:$0]  %s7, 256, %s92, [#allocation14], 64, 64, 4
    $region29: #{tpu_custom_call.1} parent=1 // pred_fallthru
      _
    // Predicated region
    $region30: #{tpu_custom_call.1} parent=1 // pred_check
      _
    $region31: #{tpu_custom_call.1} parent=1 // pred_check_branch
      %99 = sbr.rel (0) target = $region33
    $region32: #{tpu_custom_call.1} parent=1 // pred_region
      _
    $region33: #{tpu_custom_call.1} parent=1 // pred_fallthru
      _
    // Predicated region
    $region34: #{tpu_custom_call.1} parent=1 // pred_check
      _
    $region35: #{tpu_custom_call.1} parent=1 // pred_check_branch
      %101 = sbr.rel (0) target = $region37
    $region36: #{tpu_custom_call.1} parent=1 // pred_region
      _
    $region37: #{tpu_custom_call.1} parent=1 // pred_fallthru
      _
    // Predicated region
    $region38: #{tpu_custom_call.1} parent=1 // pred_check
      _
    $region39: #{tpu_custom_call.1} parent=1 // pred_check_branch
      %103 = sbr.rel (0) target = $region41
    $region40: #{tpu_custom_call.1} parent=1 // pred_region
      _
    $region41: #{tpu_custom_call.1} parent=1 // pred_fallthru
      _
    // Predicated region
    $region42: #{tpu_custom_call.1} parent=1 // pred_check
      _
    $region43: #{tpu_custom_call.1} parent=1 // pred_check_branch
      %105 = sbr.rel (0) target = $region45
    $region44: #{tpu_custom_call.1} parent=1 // pred_region
      %s107 = ssub.s32 512, 512
      %108 = vsyncadd [#allocation14], %s107
      %s109 = sshll.u32 [#allocation15], 4
      %s110 = int_to_ptr.vmem [resolvable:$true] %s109
      %115 = dma.hbm_to_vmem [thread:$0]  %s11, 512, %s110, [#allocation14], 64, 64, 4
    $region45: #{tpu_custom_call.1} parent=1 // pred_fallthru
      _
    // Predicated region
    $region46: #{tpu_custom_call.1} parent=1 // pred_check
      _
    $region47: #{tpu_custom_call.1} parent=1 // pred_check_branch
      %117 = sbr.rel (0) target = $region49
    $region48: #{tpu_custom_call.1} parent=1 // pred_region
      _
    $region49: #{tpu_custom_call.1} parent=1 // pred_fallthru
      _
    // Predicated region
    $region50: #{tpu_custom_call.1} parent=1 // pred_check
      _
    $region51: #{tpu_custom_call.1} parent=1 // pred_check_branch
      %119 = sbr.rel (0) target = $region53
    $region52: #{tpu_custom_call.1} parent=1 // pred_region
      %120 = dma.done [#allocation5], 512
    $region53: #{tpu_custom_call.1} parent=1 // pred_fallthru
      _
    // Predicated region
    $region54: #{tpu_custom_call.1} parent=1 // pred_check
      _
    $region55: #{tpu_custom_call.1} parent=1 // pred_check_branch
      %122 = sbr.rel (0) target = $region57
    $region56: #{tpu_custom_call.1} parent=1 // pred_region
      %123 = dma.done [#allocation8], 512
    $region57: #{tpu_custom_call.1} parent=1 // pred_fallthru
      _
    // Predicated region
    $region58: #{tpu_custom_call.1} parent=1 // pred_check
      _
    $region59: #{tpu_custom_call.1} parent=1 // pred_check_branch
      %125 = sbr.rel (0) target = $region61
    $region60: #{tpu_custom_call.1} parent=1 // pred_region
      %126 = dma.done [#allocation8], 512
    $region61: #{tpu_custom_call.1} parent=1 // pred_fallthru
      _
    // Predicated region
    $region62: #{tpu_custom_call.1} parent=1 // pred_check
      _
    $region63: #{tpu_custom_call.1} parent=1 // pred_check_branch
      %128 = sbr.rel (0) target = $region65
    $region64: #{tpu_custom_call.1} parent=1 // pred_region
      %129 = dma.done [#allocation11], 256
    $region65: #{tpu_custom_call.1} parent=1 // pred_fallthru
      _
    // Predicated region
    $region66: #{tpu_custom_call.1} parent=1 // pred_check
      _
    $region67: #{tpu_custom_call.1} parent=1 // pred_check_branch
      %131 = sbr.rel (0) target = $region69
    $region68: #{tpu_custom_call.1} parent=1 // pred_region
      %132 = dma.done [#allocation11], 256
    $region69: #{tpu_custom_call.1} parent=1 // pred_fallthru
      _
    // Predicated region
    $region70: #{tpu_custom_call.1} parent=1 // pred_check
      _
    $region71: #{tpu_custom_call.1} parent=1 // pred_check_branch
      %134 = sbr.rel (0) target = $region73
    $region72: #{tpu_custom_call.1} parent=1 // pred_region
      %135 = dma.done [#allocation14], 256
    $region73: #{tpu_custom_call.1} parent=1 // pred_fallthru
      _
    // Predicated region
    $region74: #{tpu_custom_call.1} parent=1 // pred_check
      _
    $region75: #{tpu_custom_call.1} parent=1 // pred_check_branch
      %137 = sbr.rel (0) target = $region77
    $region76: #{tpu_custom_call.1} parent=1 // pred_region
      %138 = dma.done [#allocation14], 512
    $region77: #{tpu_custom_call.1} parent=1 // pred_fallthru
      _
    %s140 = sld [smem:[#allocation3]]
    %p141 = scmp.ne.s32.totalorder %s140, 0
    // Predicated region
    $region78: #{tpu_custom_call.1} parent=1 // pred_check
      %p142 = pneg %p141
    $region79: #{tpu_custom_call.1} parent=1 // pred_check_branch
      %144 = sbr.rel (%p142) target = $region81
    $region80: #{tpu_custom_call.1} parent=1 // pred_region
      %v145 = vld [vmem:[#allocation4] sm:$0xff]
      %v146 = vld [vmem:[#allocation4 + $0x8] sm:$0xff]
      %v147 = vld [vmem:[#allocation4 + $0x10] sm:$0xff]
      %v148 = vld [vmem:[#allocation4 + $0x18] sm:$0xff]
      %v149 = vpack.c.bf16 %v146, %v145
      %v150 = vpack.c.bf16 %v148, %v147
      %v151 = vld [vmem:[#allocation10] sm:$0xf]
      %v152 = vld [vmem:[#allocation10 + $0x4] sm:$0xf]
      %v153 = vld [vmem:[#allocation10 + $0x8] sm:$0xf]
      %v154 = vld [vmem:[#allocation10 + $0xc] sm:$0xf]
      %v155 = vld [vmem:[#allocation7] sm:$0xff]
      %v156 = vld [vmem:[#allocation7 + $0x8] sm:$0xff]
      %v157 = vld [vmem:[#allocation7 + $0x10] sm:$0xff]
      %v158 = vld [vmem:[#allocation7 + $0x18] sm:$0xff]
      %v159 = vpack.c.bf16 %v156, %v155
      %v160 = vpack.c.bf16 %v158, %v157
      %v161 = vld [vmem:[#allocation12] sm:$0xf]
      %v162 = vld [vmem:[#allocation12 + $0x4] sm:$0xf]
      %v163 = vld [vmem:[#allocation12 + $0x8] sm:$0xf]
      %v164 = vld [vmem:[#allocation12 + $0xc] sm:$0xf]
      %v169 = vunpack.c.l.b16 %v161
      %v170 = vunpack.c.l.b16 %v162
      %v171 = vunpack.c.l.b16 %v163
      %v172 = vunpack.c.l.b16 %v164
      %v173 = vpack.c.b16 %v170, %v169
      %v174 = vpack.c.b16 %v172, %v171
      %vm177 = vcmask 261120
      %v179 = vsel %vm177, %v159, 0
      %v182 = vsel %vm177, %v160, 0
      %184 = vmatprep.subr.bf16.mxu0 0
      %185 = vmatpush1.bf16.msra.mxu0 %v173
      %186 = vmatprep.subr.bf16.mxu0 0
      %187 = vmatpush1.bf16.msra.mxu0 %v174
      %188 = vmatprep.subr.bf16.mxu0 0
      %189 = vmatpush1.bf16.msra.mxu0 0
      %190 = vmatprep.subr.bf16.mxu0 0
      %191 = vmatpush1.bf16.msra.mxu0 0
      %192 = vmatprep.subr.bf16.mxu0 0
      %193 = vmatpush1.bf16.msra.mxu0 0
      %194 = vmatprep.subr.bf16.mxu0 0
      %195 = vmatpush1.bf16.msra.mxu0 0
      %196 = vmatprep.subr.bf16.mxu0 0
      %197 = vmatpush1.bf16.msra.mxu0 0
      %198 = vmatprep.subr.bf16.mxu0 0
      %199 = vmatpush1.bf16.msra.mxu0 0
      %200 = vmatprep.subr.bf16.mxu0 0
      %201 = vmatpush1.bf16.msra.mxu0 0
      %202 = vmatprep.subr.bf16.mxu0 0
      %203 = vmatpush1.bf16.msra.mxu0 0
      %204 = vmatprep.subr.bf16.mxu0 0
      %205 = vmatpush1.bf16.msra.mxu0 0
      %206 = vmatprep.subr.bf16.mxu0 0
      %207 = vmatpush1.bf16.msra.mxu0 0
      %208 = vmatprep.subr.bf16.mxu0 0
      %209 = vmatpush1.bf16.msra.mxu0 0
      %210 = vmatprep.subr.bf16.mxu0 0
      %211 = vmatpush1.bf16.msra.mxu0 0
      %212 = vmatprep.subr.bf16.mxu0 0
      %213 = vmatpush1.bf16.msra.mxu0 0
      %214 = vmatprep.subr.bf16.mxu0 0
      %215 = vmatpush1.bf16.msra.mxu0 0
      %216 = vmatprep.mubr.bf16.mxu0 0
      %217 = vmatmul.mubr.bf16.gmra.mrb[0].mxu0 %v179
      %v218 = vpop.f32.mrb[0].mxu0
      %v219 = vadd.f32 0.0, %v218
      %v220 = vpop.f32.mrb[0].mxu0
      %v221 = vpop.f32.mrb[0].mxu0
      %v222 = vadd.f32 0.0, %v221
      %v223 = vpop.f32.mrb[0].mxu0
      %224 = vmatprep.mubr.bf16.mxu0 0
      %225 = vmatmul.mubr.bf16.gmra.mrb[0].mxu0 %v182
      %v226 = vpop.f32.mrb[0].mxu0
      %v227 = vadd.f32 0.0, %v226
      %v228 = vpop.f32.mrb[0].mxu0
      %v229 = vpop.f32.mrb[0].mxu0
      %v230 = vadd.f32 0.0, %v229
      %v231 = vpop.f32.mrb[0].mxu0
      %232 = vdwg.mxu0
      %v237 = vunpack.c.l.b16 %v151
      %v238 = vunpack.c.l.b16 %v152
      %v239 = vunpack.c.l.b16 %v153
      %v240 = vunpack.c.l.b16 %v154
      %v241 = vpack.c.b16 %v238, %v237
      %v242 = vpack.c.b16 %v240, %v239
      %v246 = vsel %vm177, %v149, 0
      %v249 = vsel %vm177, %v150, 0
      %251 = vmatprep.subr.bf16.mxu0 0
      %252 = vmatpush1.bf16.msra.mxu0 %v241
      %253 = vmatprep.subr.bf16.mxu0 0
      %254 = vmatpush1.bf16.msra.mxu0 %v242
      %255 = vmatprep.subr.bf16.mxu0 0
      %256 = vmatpush1.bf16.msra.mxu0 0
      %257 = vmatprep.subr.bf16.mxu0 0
      %258 = vmatpush1.bf16.msra.mxu0 0
      %259 = vmatprep.subr.bf16.mxu0 0
      %260 = vmatpush1.bf16.msra.mxu0 0
      %261 = vmatprep.subr.bf16.mxu0 0
      %262 = vmatpush1.bf16.msra.mxu0 0
      %263 = vmatprep.subr.bf16.mxu0 0
      %264 = vmatpush1.bf16.msra.mxu0 0
      %265 = vmatprep.subr.bf16.mxu0 0
      %266 = vmatpush1.bf16.msra.mxu0 0
      %267 = vmatprep.subr.bf16.mxu0 0
      %268 = vmatpush1.bf16.msra.mxu0 0
      %269 = vmatprep.subr.bf16.mxu0 0
      %270 = vmatpush1.bf16.msra.mxu0 0
      %271 = vmatprep.subr.bf16.mxu0 0
      %272 = vmatpush1.bf16.msra.mxu0 0
      %273 = vmatprep.subr.bf16.mxu0 0
      %274 = vmatpush1.bf16.msra.mxu0 0
      %275 = vmatprep.subr.bf16.mxu0 0
      %276 = vmatpush1.bf16.msra.mxu0 0
      %277 = vmatprep.subr.bf16.mxu0 0
      %278 = vmatpush1.bf16.msra.mxu0 0
      %279 = vmatprep.subr.bf16.mxu0 0
      %280 = vmatpush1.bf16.msra.mxu0 0
      %281 = vmatprep.subr.bf16.mxu0 0
      %282 = vmatpush1.bf16.msra.mxu0 0
      %283 = vmatprep.mubr.bf16.mxu0 0
      %284 = vmatmul.mubr.bf16.gmra.mrb[0].mxu0 %v246
      %v285 = vpop.f32.mrb[0].mxu0
      %v286 = vadd.f32 %v219, %v285
      %v287 = vpop.f32.mrb[0].mxu0
      %v288 = vpop.f32.mrb[0].mxu0
      %v289 = vadd.f32 %v222, %v288
      %v290 = vpop.f32.mrb[0].mxu0
      %291 = vmatprep.mubr.bf16.mxu0 0
      %292 = vmatmul.mubr.bf16.gmra.mrb[0].mxu0 %v249
      %v293 = vpop.f32.mrb[0].mxu0
      %v294 = vadd.f32 %v227, %v293
      %v295 = vpop.f32.mrb[0].mxu0
      %v296 = vpop.f32.mrb[0].mxu0
      %v297 = vadd.f32 %v230, %v296
      %v298 = vpop.f32.mrb[0].mxu0
      %299 = vdwg.mxu0
      %v300 = vld [vmem:[%s6] sm:$0x1]
      %v302 = vlaneseq
      %v303 = vshrl.u32 %v302, 7
      %v304 = vsub.s32 0, %v303
      %v305 = vrot.slane %v300, %v304
      %v307 = vadd.f32 %v286, %v305
      %v308 = vadd.f32 %v289, %v305
      %v309 = vadd.f32 %v294, %v305
      %v310 = vadd.f32 %v297, %v305
      %v311 = vmax.f32 %v307, 0.0
      %v312 = vmax.f32 %v308, 0.0
      %v313 = vmax.f32 %v309, 0.0
      %v314 = vmax.f32 %v310, 0.0
    $region81: #{tpu_custom_call.1} parent=1 // pred_fallthru
      %v315 = vphi 0, %v311
      %v316 = vphi 0, %v312
      %v317 = vphi 0, %v313
      %v318 = vphi 0, %v314
    %p319 = pneg %p141
    // Predicated region
    $region82: #{tpu_custom_call.1} parent=1 // pred_check
      _
    $region83: #{tpu_custom_call.1} parent=1 // pred_check_branch
      %321 = sbr.rel (%p141) target = $region85
    $region84: #{tpu_custom_call.1} parent=1 // pred_region
      %v322 = vld [vmem:[#allocation7] sm:$0xff]
      %v323 = vld [vmem:[#allocation7 + $0x8] sm:$0xff]
      %v324 = vld [vmem:[#allocation7 + $0x10] sm:$0xff]
      %v325 = vld [vmem:[#allocation7 + $0x18] sm:$0xff]
    $region85: #{tpu_custom_call.1} parent=1 // pred_fallthru
      %v326 = vphi %v315, %v322
      %v327 = vphi %v316, %v323
      %v328 = vphi %v317, %v324
      %v329 = vphi %v318, %v325
    %v330 = vpack.c.bf16 %v327, %v326
    %v331 = vpack.c.bf16 %v329, %v328
    %v332 = vld [vmem:[#allocation13] sm:$0xf]
    %v333 = vld [vmem:[#allocation13 + $0x4] sm:$0xf]
    %v334 = vld [vmem:[#allocation13 + $0x8] sm:$0xf]
    %v335 = vld [vmem:[#allocation13 + $0xc] sm:$0xf]
    %v336 = vld [vmem:[%s8] sm:$0x1]
    %v338 = vlaneseq
    %v339 = vshrl.u32 %v338, 7
    %v340 = vsub.s32 0, %v339
    %v341 = vrot.slane %v336, %v340
    %v347 = vunpack.c.l.b16 %v332
    %v348 = vunpack.c.l.b16 %v333
    %v349 = vunpack.c.l.b16 %v334
    %v350 = vunpack.c.l.b16 %v335
    %v351 = vpack.c.b16 %v348, %v347
    %v352 = vpack.c.b16 %v350, %v349
    %vm355 = vcmask 261120
    %v357 = vsel %vm355, %v330, 0
    %v360 = vsel %vm355, %v331, 0
    %362 = vmatprep.subr.bf16.mxu0 0
    %363 = vmatpush1.bf16.msra.mxu0 %v351
    %364 = vmatprep.subr.bf16.mxu0 0
    %365 = vmatpush1.bf16.msra.mxu0 %v352
    %366 = vmatprep.subr.bf16.mxu0 0
    %367 = vmatpush1.bf16.msra.mxu0 0
    %368 = vmatprep.subr.bf16.mxu0 0
    %369 = vmatpush1.bf16.msra.mxu0 0
    %370 = vmatprep.subr.bf16.mxu0 0
    %371 = vmatpush1.bf16.msra.mxu0 0
    %372 = vmatprep.subr.bf16.mxu0 0
    %373 = vmatpush1.bf16.msra.mxu0 0
    %374 = vmatprep.subr.bf16.mxu0 0
    %375 = vmatpush1.bf16.msra.mxu0 0
    %376 = vmatprep.subr.bf16.mxu0 0
    %377 = vmatpush1.bf16.msra.mxu0 0
    %378 = vmatprep.subr.bf16.mxu0 0
    %379 = vmatpush1.bf16.msra.mxu0 0
    %380 = vmatprep.subr.bf16.mxu0 0
    %381 = vmatpush1.bf16.msra.mxu0 0
    %382 = vmatprep.subr.bf16.mxu0 0
    %383 = vmatpush1.bf16.msra.mxu0 0
    %384 = vmatprep.subr.bf16.mxu0 0
    %385 = vmatpush1.bf16.msra.mxu0 0
    %386 = vmatprep.subr.bf16.mxu0 0
    %387 = vmatpush1.bf16.msra.mxu0 0
    %388 = vmatprep.subr.bf16.mxu0 0
    %389 = vmatpush1.bf16.msra.mxu0 0
    %390 = vmatprep.subr.bf16.mxu0 0
    %391 = vmatpush1.bf16.msra.mxu0 0
    %392 = vmatprep.subr.bf16.mxu0 0
    %393 = vmatpush1.bf16.msra.mxu0 0
    %394 = vmatprep.mubr.bf16.mxu0 0
    %395 = vmatmul.mubr.bf16.gmra.mrb[0].mxu0 %v357
    %v396 = vpop.f32.mrb[0].mxu0
    %v397 = vadd.f32 %v341, %v396
    %v398 = vpop.f32.mrb[0].mxu0
    %v399 = vpop.f32.mrb[0].mxu0
    %v400 = vadd.f32 %v341, %v399
    %v401 = vpop.f32.mrb[0].mxu0
    %402 = vmatprep.mubr.bf16.mxu0 0
    %403 = vmatmul.mubr.bf16.gmra.mrb[0].mxu0 %v360
    %v404 = vpop.f32.mrb[0].mxu0
    %v405 = vadd.f32 %v341, %v404
    %v406 = vpop.f32.mrb[0].mxu0
    %v407 = vpop.f32.mrb[0].mxu0
    %v408 = vadd.f32 %v341, %v407
    %v409 = vpop.f32.mrb[0].mxu0
    %410 = vdwg.mxu0
    %v411 = vmax.f32 %v397, 0.0
    %v412 = vmax.f32 %v400, 0.0
    %v413 = vmax.f32 %v405, 0.0
    %v414 = vmax.f32 %v408, 0.0
    %v415 = vpack.c.bf16 %v412, %v411
    %v416 = vpack.c.bf16 %v414, %v413
    %v417 = vld [vmem:[%s9] sm:$0xf]
    %v418 = vld [vmem:[%s9 + $0x4] sm:$0xf]
    %v419 = vld [vmem:[%s9 + $0x8] sm:$0xf]
    %v420 = vld [vmem:[%s9 + $0xc] sm:$0xf]
    %v421 = vld [vmem:[%s9 + $0x10] sm:$0xf]
    %v422 = vld [vmem:[%s9 + $0x14] sm:$0xf]
    %v423 = vld [vmem:[%s9 + $0x18] sm:$0xf]
    %v424 = vld [vmem:[%s9 + $0x1c] sm:$0xf]
    %v425 = vld [vmem:[%s10] sm:$0x1]
    %v427 = vlaneseq
    %v428 = vshrl.u32 %v427, 7
    %v429 = vsub.s32 0, %v428
    %v430 = vrot.slane %v425, %v429
    %v440 = vunpack.c.l.b16 %v417
    %v441 = vunpack.c.l.b16 %v418
    %v442 = vunpack.c.l.b16 %v419
    %v443 = vunpack.c.l.b16 %v420
    %v444 = vunpack.c.l.b16 %v421
    %v445 = vunpack.c.l.b16 %v422
    %v446 = vunpack.c.l.b16 %v423
    %v447 = vunpack.c.l.b16 %v424
    %v448 = vpack.c.b16 %v441, %v440
    %v449 = vpack.c.b16 %v443, %v442
    %v450 = vpack.c.b16 %v445, %v444
    %v451 = vpack.c.b16 %v447, %v446
    %vm456 = vcmask 523264
    %v458 = vsel %vm456, %v415, 0
    %v461 = vsel %vm456, %v416, 0
    %463 = vmatprep.subr.bf16.mxu0 0
    %464 = vmatpush1.bf16.msra.mxu0 %v448
    %465 = vmatprep.subr.bf16.mxu0 0
    %466 = vmatpush1.bf16.msra.mxu0 %v449
    %467 = vmatprep.subr.bf16.mxu0 0
    %468 = vmatpush1.bf16.msra.mxu0 %v450
    %469 = vmatprep.subr.bf16.mxu0 0
    %470 = vmatpush1.bf16.msra.mxu0 %v451
    %471 = vmatprep.subr.bf16.mxu0 0
    %472 = vmatpush1.bf16.msra.mxu0 0
    %473 = vmatprep.subr.bf16.mxu0 0
    %474 = vmatpush1.bf16.msra.mxu0 0
    %475 = vmatprep.subr.bf16.mxu0 0
    %476 = vmatpush1.bf16.msra.mxu0 0
    %477 = vmatprep.subr.bf16.mxu0 0
    %478 = vmatpush1.bf16.msra.mxu0 0
    %479 = vmatprep.subr.bf16.mxu0 0
    %480 = vmatpush1.bf16.msra.mxu0 0
    %481 = vmatprep.subr.bf16.mxu0 0
    %482 = vmatpush1.bf16.msra.mxu0 0
    %483 = vmatprep.subr.bf16.mxu0 0
    %484 = vmatpush1.bf16.msra.mxu0 0
    %485 = vmatprep.subr.bf16.mxu0 0
    %486 = vmatpush1.bf16.msra.mxu0 0
    %487 = vmatprep.subr.bf16.mxu0 0
    %488 = vmatpush1.bf16.msra.mxu0 0
    %489 = vmatprep.subr.bf16.mxu0 0
    %490 = vmatpush1.bf16.msra.mxu0 0
    %491 = vmatprep.subr.bf16.mxu0 0
    %492 = vmatpush1.bf16.msra.mxu0 0
    %493 = vmatprep.subr.bf16.mxu0 0
    %494 = vmatpush1.bf16.msra.mxu0 0
    %495 = vmatprep.mubr.bf16.mxu0 0
    %496 = vmatmul.mubr.bf16.gmra.mrb[0].mxu0 %v458
    %v497 = vpop.f32.mrb[0].mxu0
    %v498 = vadd.f32 %v430, %v497
    %v499 = vpop.f32.mrb[0].mxu0
    %v500 = vpop.f32.mrb[0].mxu0
    %v501 = vadd.f32 %v430, %v500
    %v502 = vpop.f32.mrb[0].mxu0
    %503 = vmatprep.mubr.bf16.mxu0 0
    %504 = vmatmul.mubr.bf16.gmra.mrb[0].mxu0 %v461
    %v505 = vpop.f32.mrb[0].mxu0
    %v506 = vadd.f32 %v430, %v505
    %v507 = vpop.f32.mrb[0].mxu0
    %v508 = vpop.f32.mrb[0].mxu0
    %v509 = vadd.f32 %v430, %v508
    %v510 = vpop.f32.mrb[0].mxu0
    %511 = vdwg.mxu0
    %v512 = vmax.f32 %v498, 0.0
    %v513 = vmax.f32 %v501, 0.0
    %v514 = vmax.f32 %v506, 0.0
    %v515 = vmax.f32 %v509, 0.0
    %v516 = vpack.c.bf16 %v513, %v512
    %v517 = vpack.c.bf16 %v515, %v514
    %v518 = vld [vmem:[#allocation15] sm:$0xf]
    %v519 = vld [vmem:[#allocation15 + $0x4] sm:$0xf]
    %v520 = vld [vmem:[#allocation15 + $0x8] sm:$0xf]
    %v521 = vld [vmem:[#allocation15 + $0xc] sm:$0xf]
    %v522 = vld [vmem:[#allocation15 + $0x10] sm:$0xf]
    %v523 = vld [vmem:[#allocation15 + $0x14] sm:$0xf]
    %v524 = vld [vmem:[#allocation15 + $0x18] sm:$0xf]
    %v525 = vld [vmem:[#allocation15 + $0x1c] sm:$0xf]
    %v526 = vld [vmem:[%s12] sm:$0x1]
    %v528 = vlaneseq
    %v529 = vshrl.u32 %v528, 7
    %v530 = vsub.s32 0, %v529
    %v531 = vrot.slane %v526, %v530
    %v541 = vunpack.c.l.b16 %v518
    %v542 = vunpack.c.l.b16 %v519
    %v543 = vunpack.c.l.b16 %v520
    %v544 = vunpack.c.l.b16 %v521
    %v545 = vunpack.c.l.b16 %v522
    %v546 = vunpack.c.l.b16 %v523
    %v547 = vunpack.c.l.b16 %v524
    %v548 = vunpack.c.l.b16 %v525
    %v549 = vpack.c.b16 %v542, %v541
    %v550 = vpack.c.b16 %v544, %v543
    %v551 = vpack.c.b16 %v546, %v545
    %v552 = vpack.c.b16 %v548, %v547
    %v558 = vsel %vm456, %v516, 0
    %v561 = vsel %vm456, %v517, 0
    %563 = vmatprep.subr.bf16.mxu0 0
    %564 = vmatpush1.bf16.msra.mxu0 %v549
    %565 = vmatprep.subr.bf16.mxu0 0
    %566 = vmatpush1.bf16.msra.mxu0 %v550
    %567 = vmatprep.subr.bf16.mxu0 0
    %568 = vmatpush1.bf16.msra.mxu0 %v551
    %569 = vmatprep.subr.bf16.mxu0 0
    %570 = vmatpush1.bf16.msra.mxu0 %v552
    %571 = vmatprep.subr.bf16.mxu0 0
    %572 = vmatpush1.bf16.msra.mxu0 0
    %573 = vmatprep.subr.bf16.mxu0 0
    %574 = vmatpush1.bf16.msra.mxu0 0
    %575 = vmatprep.subr.bf16.mxu0 0
    %576 = vmatpush1.bf16.msra.mxu0 0
    %577 = vmatprep.subr.bf16.mxu0 0
    %578 = vmatpush1.bf16.msra.mxu0 0
    %579 = vmatprep.subr.bf16.mxu0 0
    %580 = vmatpush1.bf16.msra.mxu0 0
    %581 = vmatprep.subr.bf16.mxu0 0
    %582 = vmatpush1.bf16.msra.mxu0 0
    %583 = vmatprep.subr.bf16.mxu0 0
    %584 = vmatpush1.bf16.msra.mxu0 0
    %585 = vmatprep.subr.bf16.mxu0 0
    %586 = vmatpush1.bf16.msra.mxu0 0
    %587 = vmatprep.subr.bf16.mxu0 0
    %588 = vmatpush1.bf16.msra.mxu0 0
    %589 = vmatprep.subr.bf16.mxu0 0
    %590 = vmatpush1.bf16.msra.mxu0 0
    %591 = vmatprep.subr.bf16.mxu0 0
    %592 = vmatpush1.bf16.msra.mxu0 0
    %593 = vmatprep.subr.bf16.mxu0 0
    %594 = vmatpush1.bf16.msra.mxu0 0
    %595 = vmatprep.mubr.bf16.mxu0 0
    %596 = vmatmul.mubr.bf16.gmra.mrb[0].mxu0 %v558
    %v597 = vpop.f32.mrb[0].mxu0
    %v598 = vadd.f32 %v531, %v597
    %v599 = vpop.f32.mrb[0].mxu0
    %v600 = vpop.f32.mrb[0].mxu0
    %v601 = vadd.f32 %v531, %v600
    %v602 = vpop.f32.mrb[0].mxu0
    %603 = vmatprep.mubr.bf16.mxu0 0
    %604 = vmatmul.mubr.bf16.gmra.mrb[0].mxu0 %v561
    %v605 = vpop.f32.mrb[0].mxu0
    %v606 = vadd.f32 %v531, %v605
    %v607 = vpop.f32.mrb[0].mxu0
    %v608 = vpop.f32.mrb[0].mxu0
    %v609 = vadd.f32 %v531, %v608
    %v610 = vpop.f32.mrb[0].mxu0
    %611 = vdwg.mxu0
    %v612 = vmax.f32 %v598, 0.0
    %v613 = vmax.f32 %v601, 0.0
    %v614 = vmax.f32 %v606, 0.0
    %v615 = vmax.f32 %v609, 0.0
    %v616 = vlaneseq
    %v617 = vand.u32 %v616, 127
    %vm618 = vcmp.lt.s32.totalorder %v617, 16
    %v619 = vsel %vm618, %v612, -3.4e+38
    %v620 = vsel %vm618, %v613, -3.4e+38
    %v621 = vsel %vm618, %v614, -3.4e+38
    %v622 = vsel %vm618, %v615, -3.4e+38
    %623 = vmax.xlane.f32.xlu0 %v619
    %v624 = vpop.xlane.xlu0 %623
    %625 = vmax.xlane.f32.xlu0 %v620
    %v626 = vpop.xlane.xlu0 %625
    %627 = vmax.xlane.f32.xlu0 %v621
    %v628 = vpop.xlane.xlu0 %627
    %629 = vmax.xlane.f32.xlu0 %v622
    %v630 = vpop.xlane.xlu0 %629
    %v631 = vsub.f32 %v619, %v624
    %v632 = vsub.f32 %v620, %v626
    %v633 = vsub.f32 %v621, %v628
    %v634 = vsub.f32 %v622, %v630
    %v635 = vmul.f32 %v631, 1.442695
    %v636 = vpow.pop %v635
    %v637 = vmul.f32 %v632, 1.442695
    %v638 = vpow.pop %v637
    %v639 = vmul.f32 %v633, 1.442695
    %v640 = vpow.pop %v639
    %v641 = vmul.f32 %v634, 1.442695
    %v642 = vpow.pop %v641
    %643 = vadd.xlane.f32.xlu0 %v636
    %v644 = vpop.xlane.xlu0 %643
    %645 = vadd.xlane.f32.xlu0 %v638
    %v646 = vpop.xlane.xlu0 %645
    %647 = vadd.xlane.f32.xlu0 %v640
    %v648 = vpop.xlane.xlu0 %647
    %649 = vadd.xlane.f32.xlu0 %v642
    %v650 = vpop.xlane.xlu0 %649
    %v651 = vrcp.pop %v644
    %v652 = vrcp.pop %v646
    %v653 = vrcp.pop %v648
    %v654 = vrcp.pop %v650
    %v655 = vmul.f32 %v636, %v651
    %v656 = vmul.f32 %v638, %v652
    %v657 = vmul.f32 %v640, %v653
    %v658 = vmul.f32 %v642, %v654
    %v659 = vld [vmem:[#allocation9] sm:$0xff]
    %v660 = vld [vmem:[#allocation9 + $0x8] sm:$0xff]
    %v661 = vld [vmem:[#allocation9 + $0x10] sm:$0xff]
    %v662 = vld [vmem:[#allocation9 + $0x18] sm:$0xff]
    %v663 = vlog2.pop %v659
    %v664 = vmul.f32 %v663, 0.6931472
    %v665 = vlog2.pop %v660
    %v666 = vmul.f32 %v665, 0.6931472
    %v667 = vlog2.pop %v661
    %v668 = vmul.f32 %v667, 0.6931472
    %v669 = vlog2.pop %v662
    %v670 = vmul.f32 %v669, 0.6931472
    %v671 = vmax.f32 %v664, -3.4e+38
    %v672 = vmax.f32 %v666, -3.4e+38
    %v673 = vmax.f32 %v668, -3.4e+38
    %v674 = vmax.f32 %v670, -3.4e+38
    %v675 = vadd.f32 %v655, %v671
    %v676 = vadd.f32 %v656, %v672
    %v677 = vadd.f32 %v657, %v673
    %v678 = vadd.f32 %v658, %v674
    %679 = vst [vmem:[#allocation16] sm:$0xff] %v675
    %680 = vst [vmem:[#allocation16 + $0x8] sm:$0xff] %v676
    %681 = vst [vmem:[#allocation16 + $0x10] sm:$0xff] %v677
    %682 = vst [vmem:[#allocation16 + $0x18] sm:$0xff] %v678
    // Predicated region
    $region86: #{tpu_custom_call.1} parent=1 // pred_check
      _
    $region87: #{tpu_custom_call.1} parent=1 // pred_check_branch
      %684 = sbr.rel (0) target = $region89
    $region88: #{tpu_custom_call.1} parent=1 // pred_region
      %s686 = ssub.s32 512, 512
      %687 = vsyncadd [#allocation6], %s686
      %s688 = sshll.u32 [#allocation16], 4
      %s689 = int_to_ptr.vmem [resolvable:$true] %s688
      %694 = dma.vmem_to_hbm [thread:$0]  %s689, 512, %s13, [#allocation6], 128, 128, 8
    $region89: #{tpu_custom_call.1} parent=1 // pred_fallthru
      _
    // Predicated region
    $region90: #{tpu_custom_call.1} parent=1 // pred_check
      _
    $region91: #{tpu_custom_call.1} parent=1 // pred_check_branch
      %696 = sbr.rel (0) target = $region93
    $region92: #{tpu_custom_call.1} parent=1 // pred_region
      %697 = dma.done [#allocation6], 512
    $region93: #{tpu_custom_call.1} parent=1 // pred_fallthru
      _
    %698 = vsyncpa [#allocation5], 1
    %699 = vsyncpa [#allocation8], 1
    %700 = vsyncpa [#allocation11], 1
    %701 = vsyncpa [#allocation14], 1
    %702 = vsyncpa [#allocation6], 1

</llo_original>
